<compile_context>
chip_gen: v5e
topology: v5e:2x2
jax: 0.10.0
libtpu: 0.0.40
codegen_flags: <defaults>
</compile_context>

<pallas_src>
import jax
import jax.numpy as jnp
from jax.experimental import pallas as pl
from jax.experimental.pallas import tpu as pltpu


def _ce_loss_kernel(pred_ref, tgt_ref, w_ref, loss_ref, num_ref, den_ref):
    i = pl.program_id(0)

    @pl.when(i == 0)
    def _init():
        num_ref[...] = jnp.zeros_like(num_ref)
        den_ref[...] = jnp.zeros_like(den_ref)

    # In-kernel upcast; HBM traffic stays at the native width.
    logits = pred_ref[...].astype(jnp.float32)            # (TN, C)
    tgt = tgt_ref[...]                                     # (TN, 1) int32
    w = w_ref[...]                                         # (1, C) f32 (resident)

    # Numerically stable logsumexp along the class (lane) axis.
    m = jnp.max(logits, axis=-1, keepdims=True)            # (TN, 1)
    lse = jnp.log(jnp.sum(jnp.exp(logits - m), axis=-1, keepdims=True)) + m

    # One-hot of the target via iota compare.  Rows with tgt == -1 (ignore
    # index, including the zero-padded tail rows) are all-zero, so picked == 0
    # and w_t == 0 -> they contribute nothing to numerator or denominator.
    col = jax.lax.broadcasted_iota(jnp.int32, logits.shape, dimension=1)
    onehot = (col == tgt).astype(jnp.float32)               # (TN, C)
    picked = jnp.sum(onehot * logits, axis=-1, keepdims=True)  # (TN, 1) target logit
    w_t = jnp.sum(onehot * w, axis=-1, keepdims=True)          # (TN, 1) target weight

    # Accumulate partial sums across the (arbitrary) N axis.
    num_ref[...] += jnp.sum(w_t * (lse - picked), keepdims=True)
    den_ref[...] += jnp.sum(w_t, keepdims=True)

    # Single divide at the very end (per-tile divides would be wrong).
    @pl.when(i == pl.num_programs(0) - 1)
    def _finalize():
        loss_ref[...] = num_ref[...] / den_ref[...]


def multi_route_loss(predictions, targets, class_weights=None, *, block_rows=None):
    """Pallas equivalent of MultiRouteLoss.forward(predictions, targets).

    predictions:   (N, C) float logits (any float dtype; cast to f32 in-kernel)
    targets:       (N,)   int class indices, -1 means "ignore"
    class_weights: optional (C,) per-class weights
    """
    n, c = predictions.shape
    if class_weights is None:
        class_weights = jnp.ones((c,), jnp.float32)

    # Row tile: ~2 MiB of native-dtype logits per buffer -> good pipelining,
    # and the double-buffered working set fits comfortably inside every
    # generation's scoped-VMEM default.
    if block_rows is None:
        bytes_per_row = max(int(c) * predictions.dtype.itemsize, 1)
        tn = (2 * 1024 * 1024) // bytes_per_row
        tn = max(8, min(32768, (tn // 8) * 8))
    else:
        tn = max(8, (int(block_rows) // 8) * 8)
    n_rounded = ((n + 7) // 8) * 8
    tn = min(tn, n_rounded)

    n_blocks = (n + tn - 1) // tn
    n_pad = n_blocks * tn

    preds = predictions                       # keep native dtype (no wrapper upcast)
    tgt = targets.astype(jnp.int32)
    if n_pad != n:
        # Zero-pad logits (keeps logsumexp finite) and mark padded rows as
        # ignored so they contribute nothing.
        preds = jnp.pad(preds, ((0, n_pad - n), (0, 0)))
        tgt = jnp.pad(tgt, (0, n_pad - n), constant_values=-1)
    tgt2d = tgt.reshape(n_pad, 1)
    w2d = class_weights.astype(jnp.float32).reshape(1, c)

    bytes_accessed = (preds.size * preds.dtype.itemsize
                      + tgt2d.size * 4 + w2d.size * 4 + 4)

    loss = pl.pallas_call(
        _ce_loss_kernel,
        out_shape=jax.ShapeDtypeStruct((1, 1), jnp.float32),
        grid=(n_blocks,),
        in_specs=[
            pl.BlockSpec((tn, c), lambda i: (i, 0)),     # streamed logits tile
            pl.BlockSpec((tn, 1), lambda i: (i, 0)),     # streamed targets tile
            pl.BlockSpec((1, c), lambda i: (0, 0)),      # resident class weights
        ],
        out_specs=pl.BlockSpec((1, 1), lambda i: (0, 0)),  # resident scalar output
        scratch_shapes=[
            pltpu.VMEM((1, 1), jnp.float32),   # running numerator
            pltpu.VMEM((1, 1), jnp.float32),   # running denominator
        ],
        compiler_params=pltpu.CompilerParams(
            dimension_semantics=("arbitrary",),          # reduction/accumulator axis
        ),
        cost_estimate=pl.CostEstimate(
            flops=6 * n_pad * c,
            transcendentals=n_pad * c + n_pad,
            bytes_accessed=int(bytes_accessed),
        ),
    )(preds, tgt2d, w2d)
    return loss[0, 0]


def _reference_loss(pred, tgt, w):
    # Pure-JAX reference of torch CrossEntropyLoss(weight=w, ignore_index=-1).
    logp = jax.nn.log_softmax(pred.astype(jnp.float32), axis=-1)
    valid = (tgt != -1)
    safe_t = jnp.where(valid, tgt, 0)
    picked = jnp.take_along_axis(logp, safe_t[:, None], axis=-1)[:, 0]
    wt = w[safe_t] * valid.astype(jnp.float32)
    return jnp.sum(-picked * wt) / jnp.sum(wt)


if __name__ == "__main__":
    key = jax.random.PRNGKey(0)

    # --- Test 1: small shapes matching the module (N samples x route classes).
    N, NUM_ROUTE_CLASSES = 8, 16
    k_pred, k_tgt, k_w, k2_pred, k2_tgt = jax.random.split(key, 5)

    predictions = jax.random.normal(k_pred, (N, NUM_ROUTE_CLASSES), jnp.float32)
    targets = jax.random.randint(k_tgt, (N,), 0, NUM_ROUTE_CLASSES, jnp.int32)
    targets = targets.at[1].set(-1).at[5].set(-1)        # ignored entries
    class_weights = 0.5 + jax.random.uniform(k_w, (NUM_ROUTE_CLASSES,), jnp.float32)

    loss = multi_route_loss(predictions, targets, class_weights)
    jax.block_until_ready(loss)
    ref = _reference_loss(predictions, targets, class_weights)
    assert jnp.allclose(loss, ref, atol=1e-5, rtol=1e-5), (loss, ref)

    # --- Test 2: exercises multi-tile accumulation + tail padding + bf16 input.
    N2 = 40
    predictions2 = jax.random.normal(k2_pred, (N2, NUM_ROUTE_CLASSES), jnp.float32)
    predictions2_bf16 = predictions2.astype(jnp.bfloat16)
    targets2 = jax.random.randint(k2_tgt, (N2,), 0, NUM_ROUTE_CLASSES, jnp.int32)
    targets2 = targets2.at[0].set(-1).at[17].set(-1).at[39].set(-1)

    loss2 = multi_route_loss(predictions2_bf16, targets2, class_weights, block_rows=16)
    jax.block_until_ready(loss2)
    ref2 = _reference_loss(predictions2_bf16.astype(jnp.float32), targets2, class_weights)
    assert jnp.allclose(loss2, ref2, atol=1e-5, rtol=1e-5), (loss2, ref2)

    print("KERNEL_OK")
</pallas_src>

<mosaic_0001>
module attributes {stable_mosaic.version = 11 : i64} {
  func.func @_ce_loss_kernel(%arg0: i32, %arg1: memref<8x16xf32, #tpu.memory_space<vmem>>, %arg2: memref<8x1xi32, #tpu.memory_space<vmem>>, %arg3: memref<1x16xf32, #tpu.memory_space<vmem>>, %arg4: memref<1x1xf32, #tpu.memory_space<vmem>>, %arg5: memref<1x1xf32, #tpu.memory_space<vmem>>, %arg6: memref<1x1xf32, #tpu.memory_space<vmem>>) attributes {dimension_semantics = [#tpu.dimension_semantics<arbitrary>], iteration_bounds = array<i64: 1>, scalar_prefetch = 0 : i64, scratch_operands = 2 : i64, tpu.core_type = #tpu.core_type<tc>, window_params = [{transform_indices = @transform_0, window_bounds = array<i64: 8, 16>}, {transform_indices = @transform_1, window_bounds = array<i64: 8, 1>}, {pipeline_mode = #tpu.pipeline_mode<synchronous>, transform_indices = @transform_2, window_bounds = array<i64: 1, 16>}, {pipeline_mode = #tpu.pipeline_mode<synchronous>, transform_indices = @transform_3, window_bounds = array<i64: 1, 1>}]} {
    %c0_i32 = arith.constant 0 : i32
    %0 = arith.cmpi eq, %arg0, %c0_i32 : i32
    %1 = arith.extui %0 : i1 to i32
    %c0_i32_0 = arith.constant 0 : i32
    %2 = arith.cmpi ne, %1, %c0_i32_0 : i32
    scf.if %2 {
      %cst_21 = arith.constant 0.000000e+00 : f32
      %48 = vector.broadcast %cst_21 : f32 to vector<1x1xf32>
      %c0_22 = arith.constant 0 : index
      %c0_23 = arith.constant 0 : index
      %49 = vector.load %arg5[%c0_22, %c0_23] : memref<1x1xf32, #tpu.memory_space<vmem>>, vector<1x1xf32>
      tpu.vector_store %arg5[%c0_22, %c0_23], %48 {strides = array<i32>} : memref<1x1xf32, #tpu.memory_space<vmem>>, vector<1x1xf32>,
      %cst_24 = arith.constant 0.000000e+00 : f32
      %50 = vector.broadcast %cst_24 : f32 to vector<1x1xf32>
      %c0_25 = arith.constant 0 : index
      %c0_26 = arith.constant 0 : index
      %51 = vector.load %arg6[%c0_25, %c0_26] : memref<1x1xf32, #tpu.memory_space<vmem>>, vector<1x1xf32>
      tpu.vector_store %arg6[%c0_25, %c0_26], %50 {strides = array<i32>} : memref<1x1xf32, #tpu.memory_space<vmem>>, vector<1x1xf32>,
    } else {
    }
    %c0 = arith.constant 0 : index
    %c0_1 = arith.constant 0 : index
    %3 = vector.load %arg1[%c0, %c0_1] : memref<8x16xf32, #tpu.memory_space<vmem>>, vector<8x16xf32>
    %c0_2 = arith.constant 0 : index
    %c0_3 = arith.constant 0 : index
    %4 = vector.load %arg2[%c0_2, %c0_3] : memref<8x1xi32, #tpu.memory_space<vmem>>, vector<8x1xi32>
    %c0_4 = arith.constant 0 : index
    %c0_5 = arith.constant 0 : index
    %5 = vector.load %arg3[%c0_4, %c0_5] : memref<1x16xf32, #tpu.memory_space<vmem>>, vector<1x16xf32>
    %cst = arith.constant dense<0xFF800000> : vector<8xf32>
    %6 = vector.multi_reduction <maximumf>, %3, %cst [1] : vector<8x16xf32> to vector<8xf32>
    %7 = vector.shape_cast %6 : vector<8xf32> to vector<8x1xf32>
    %8 = vector.broadcast %7 : vector<8x1xf32> to vector<8x16xf32>
    %9 = arith.subf %3, %8 : vector<8x16xf32>
    %10 = math.exp %9 : vector<8x16xf32>
    %cst_6 = arith.constant dense<0.000000e+00> : vector<8xf32>
    %11 = vector.multi_reduction <add>, %10, %cst_6 [1] : vector<8x16xf32> to vector<8xf32>
    %12 = vector.shape_cast %11 : vector<8xf32> to vector<8x1xf32>
    %13 = math.log %12 : vector<8x1xf32>
    %14 = arith.addf %13, %7 : vector<8x1xf32>
    %15 = tpu.iota {dimensions = array<i32: 1>} : vector<8x16xi32>
    %16 = vector.broadcast %4 : vector<8x1xi32> to vector<8x16xi32>
    %17 = arith.cmpi eq, %15, %16 : vector<8x16xi32>
    %18 = arith.extui %17 : vector<8x16xi1> to vector<8x16xi32>
    %19 = arith.sitofp %18 : vector<8x16xi32> to vector<8x16xf32>
    %20 = arith.mulf %19, %3 : vector<8x16xf32>
    %cst_7 = arith.constant dense<0.000000e+00> : vector<8xf32>
    %21 = vector.multi_reduction <add>, %20, %cst_7 [1] : vector<8x16xf32> to vector<8xf32>
    %22 = vector.shape_cast %21 : vector<8xf32> to vector<8x1xf32>
    %23 = vector.broadcast %5 : vector<1x16xf32> to vector<8x16xf32>
    %24 = arith.mulf %19, %23 : vector<8x16xf32>
    %cst_8 = arith.constant dense<0.000000e+00> : vector<8xf32>
    %25 = vector.multi_reduction <add>, %24, %cst_8 [1] : vector<8x16xf32> to vector<8xf32>
    %26 = vector.shape_cast %25 : vector<8xf32> to vector<8x1xf32>
    %c0_9 = arith.constant 0 : index
    %c0_10 = arith.constant 0 : index
    %27 = vector.load %arg5[%c0_9, %c0_10] : memref<1x1xf32, #tpu.memory_space<vmem>>, vector<1x1xf32>
    %28 = arith.subf %14, %22 : vector<8x1xf32>
    %29 = arith.mulf %26, %28 : vector<8x1xf32>
    %30 = vector.shape_cast %29 : vector<8x1xf32> to vector<1x8x1xf32>
    %cst_11 = arith.constant dense<0.000000e+00> : vector<1xf32>
    %31 = vector.multi_reduction <add>, %30, %cst_11 [1, 2] : vector<1x8x1xf32> to vector<1xf32>
    %32 = vector.shape_cast %31 : vector<1xf32> to vector<1x1x1xf32>
    %33 = vector.extract %32[0, 0, 0] : f32 from vector<1x1x1xf32>
    %34 = vector.broadcast %33 : f32 to vector<1x1xf32>
    %35 = arith.addf %27, %34 : vector<1x1xf32>
    %c0_12 = arith.constant 0 : index
    %c0_13 = arith.constant 0 : index
    %36 = vector.load %arg5[%c0_12, %c0_13] : memref<1x1xf32, #tpu.memory_space<vmem>>, vector<1x1xf32>
    tpu.vector_store %arg5[%c0_12, %c0_13], %35 {strides = array<i32>} : memref<1x1xf32, #tpu.memory_space<vmem>>, vector<1x1xf32>,
    %c0_14 = arith.constant 0 : index
    %c0_15 = arith.constant 0 : index
    %37 = vector.load %arg6[%c0_14, %c0_15] : memref<1x1xf32, #tpu.memory_space<vmem>>, vector<1x1xf32>
    %38 = vector.shape_cast %26 : vector<8x1xf32> to vector<1x8x1xf32>
    %cst_16 = arith.constant dense<0.000000e+00> : vector<1xf32>
    %39 = vector.multi_reduction <add>, %38, %cst_16 [1, 2] : vector<1x8x1xf32> to vector<1xf32>
    %40 = vector.shape_cast %39 : vector<1xf32> to vector<1x1x1xf32>
    %41 = vector.extract %40[0, 0, 0] : f32 from vector<1x1x1xf32>
    %42 = vector.broadcast %41 : f32 to vector<1x1xf32>
    %43 = arith.addf %37, %42 : vector<1x1xf32>
    %c0_17 = arith.constant 0 : index
    %c0_18 = arith.constant 0 : index
    %44 = vector.load %arg6[%c0_17, %c0_18] : memref<1x1xf32, #tpu.memory_space<vmem>>, vector<1x1xf32>
    tpu.vector_store %arg6[%c0_17, %c0_18], %43 {strides = array<i32>} : memref<1x1xf32, #tpu.memory_space<vmem>>, vector<1x1xf32>,
    %c0_i32_19 = arith.constant 0 : i32
    %45 = arith.cmpi eq, %arg0, %c0_i32_19 : i32
    %46 = arith.extui %45 : i1 to i32
    %c0_i32_20 = arith.constant 0 : i32
    %47 = arith.cmpi ne, %46, %c0_i32_20 : i32
    scf.if %47 {
      %c0_21 = arith.constant 0 : index
      %c0_22 = arith.constant 0 : index
      %48 = vector.load %arg5[%c0_21, %c0_22] : memref<1x1xf32, #tpu.memory_space<vmem>>, vector<1x1xf32>
      %c0_23 = arith.constant 0 : index
      %c0_24 = arith.constant 0 : index
      %49 = vector.load %arg6[%c0_23, %c0_24] : memref<1x1xf32, #tpu.memory_space<vmem>>, vector<1x1xf32>
      %50 = arith.divf %48, %49 : vector<1x1xf32>
      %c0_25 = arith.constant 0 : index
      %c0_26 = arith.constant 0 : index
      %51 = vector.load %arg4[%c0_25, %c0_26] : memref<1x1xf32, #tpu.memory_space<vmem>>, vector<1x1xf32>
      tpu.vector_store %arg4[%c0_25, %c0_26], %50 {strides = array<i32>} : memref<1x1xf32, #tpu.memory_space<vmem>>, vector<1x1xf32>,
    } else {
    }
    return
  }
  func.func @transform_0(%arg0: i32) -> (i32, i32) {
    %c0_i32 = arith.constant 0 : i32
    %c0_i32_0 = arith.constant 0 : i32
    return %arg0, %c0_i32 : i32, i32
  }
  func.func @transform_1(%arg0: i32) -> (i32, i32) {
    %c0_i32 = arith.constant 0 : i32
    %c0_i32_0 = arith.constant 0 : i32
    return %arg0, %c0_i32 : i32, i32
  }
  func.func @transform_2(%arg0: i32) -> (i32, i32) {
    %c0_i32 = arith.constant 0 : i32
    %c0_i32_0 = arith.constant 0 : i32
    %c0_i32_1 = arith.constant 0 : i32
    return %c0_i32, %c0_i32_0 : i32, i32
  }
  func.func @transform_3(%arg0: i32) -> (i32, i32) {
    %c0_i32 = arith.constant 0 : i32
    %c0_i32_0 = arith.constant 0 : i32
    %c0_i32_1 = arith.constant 0 : i32
    return %c0_i32, %c0_i32_0 : i32, i32
  }
}

</mosaic_0001>

<llo_original>
// kernel: tpu_custom_call.1
$region0: #{tpu_custom_call.1}
  #allocation0 [shape = 'u32[]', space=smem, size = 0x4, offset = 0x4, fixed_abs, tag = 'smem constant byte address 0x4 - core index']
  #allocation1 [shape = 'u32[72,128]{1,0:T(1,128)}', space=vmem, size = 0x9000, scoped, tag = 'internal scratch']
  #allocation2 [shape = 'f32[1,1]{1,0:T(1,128)}', space=vmem, size = 0x200, scoped, tag = 'scratch operand']
  #allocation3 [shape = 'f32[1,1]{1,0:T(1,128)}', space=vmem, size = 0x200, scoped, tag = 'scratch operand']
  %s0 = inlined_call_operand.vmem [shape: f32[8,16], index: 0, kind: input, shape index: {}]
  %s1 = inlined_call_operand.vmem [shape: s32[8,1], index: 1, kind: input, shape index: {}]
  %s2 = inlined_call_operand.vmem [shape: f32[1,16], index: 2, kind: input, shape index: {}]
  %s3 = inlined_call_operand.hbm [shape: f32[1,1], index: 3, kind: output, shape index: {}]
  %s4 = sld [smem:[#allocation0]]
  $region30: #{tpu_custom_call.1} parent=0
    _
  %s6 = ssub.s32 1, %s4
  %s7 = scalar_select 0, %s6, %s4
  $region1: #{tpu_custom_call.1} parent=0
    #allocation4 [shape = 'u8[512]{0}', space=vmem, size = 0x400, scoped, tag = 'output window, operand 0, single buffered']
    #allocation5 [shape = 's32[1]{0}', space=sflag, size = 0x4, scoped, tag = 'scoped memory for tpu_custom_call.1']
    %8 = vsyncpa [#allocation5], 0
    // Predicated region
    $region2: #{tpu_custom_call.1} parent=1 // pred_check
      _
    $region3: #{tpu_custom_call.1} parent=1 // pred_check_branch
      %10 = sbr.rel (0) target = $region5
    $region4: #{tpu_custom_call.1} parent=1 // pred_region
      _
    $region5: #{tpu_custom_call.1} parent=1 // pred_fallthru
      _
    // Predicated region
    $region6: #{tpu_custom_call.1} parent=1 // pred_check
      _
    $region7: #{tpu_custom_call.1} parent=1 // pred_check_branch
      %12 = sbr.rel (0) target = $region9
    $region8: #{tpu_custom_call.1} parent=1 // pred_region
      _
    $region9: #{tpu_custom_call.1} parent=1 // pred_fallthru
      _
    // Predicated region
    $region10: #{tpu_custom_call.1} parent=1 // pred_check
      _
    $region11: #{tpu_custom_call.1} parent=1 // pred_check_branch
      %14 = sbr.rel (0) target = $region13
    $region12: #{tpu_custom_call.1} parent=1 // pred_region
      _
    $region13: #{tpu_custom_call.1} parent=1 // pred_fallthru
      _
    %p15 = scmp.eq.s32.totalorder 0, 0
    // Predicated region
    $region14: #{tpu_custom_call.1} parent=1 // pred_check
      %p16 = pneg %p15
    $region15: #{tpu_custom_call.1} parent=1 // pred_check_branch
      %18 = sbr.rel (%p16) target = $region17
    $region16: #{tpu_custom_call.1} parent=1 // pred_region
      %vm19 = vcmask 0
      %20 = vst.msk [vmem:[#allocation2] sm:$0x1] %vm19, 0.0
      %21 = vst.msk [vmem:[#allocation3] sm:$0x1] %vm19, 0.0
    $region17: #{tpu_custom_call.1} parent=1 // pred_fallthru
      _
    %v22 = vld [vmem:[%s0] sm:$0xff]
    %v23 = vld [vmem:[%s1] sm:$0xff]
    %v24 = vld [vmem:[%s2] sm:$0x1]
    %vm25 = vcmask 130048
    %v26 = vsel %vm25, %v22, -inf
    %27 = vmax.xlane.f32.xlu0 %v26
    %v28 = vpop.xlane.xlu0 %27
    %v29 = vsub.f32 %v22, %v28
    %v30 = vmul.f32 %v29, 1.442695
    %v31 = vpow.pop %v30
    %v32 = vsel %vm25, %v31, 0.0
    %33 = vadd.xlane.f32.xlu0 %v32
    %v34 = vpop.xlane.xlu0 %33
    %v35 = vlog2.pop %v34
    %v36 = vmul.f32 %v35, 0.6931472
    %v37 = vadd.f32 %v36, %v28
    %v38 = vlaneseq
    %v39 = vand.u32 %v38, 127
    %40 = vset.pattern.permute.xlu0 0
    %41 = vperm.xlu0 %40, %v23
    %v42 = vpop.permute.xlu0 %41
    %vm43 = vcmp.eq.s32.totalorder %v39, %v42
    %v44 = vsel %vm43, 1, 0
    %v45 = vcvt.s32.f32 %v44
    %v46 = vmul.f32 %v45, %v22
    %v47 = vsel %vm25, %v46, 0.0
    %48 = vadd.xlane.f32.xlu0 %v47
    %v49 = vpop.xlane.xlu0 %48
    %v51 = vperm.slane %v24, 0
    %v53 = vmul.f32 %v45, %v51
    %v54 = vsel %vm25, %v53, 0.0
    %55 = vadd.xlane.f32.xlu0 %v54
    %v56 = vpop.xlane.xlu0 %55
    %v57 = vld [vmem:[#allocation2] sm:$0x1]
    %v58 = vsub.f32 %v37, %v49
    %v59 = vmul.f32 %v56, %v58
    %vm60 = vcmask 7168
    %v61 = vsel %vm60, %v59, 0.0
    %62 = vadd.xlane.f32.xlu0 %v61
    %v63 = vpop.xlane.xlu0 %62
    %v64 = vrot.slane %v63, 4
    %v65 = vadd.f32 %v63, %v64
    %v66 = vrot.slane %v65, 2
    %v67 = vadd.f32 %v65, %v66
    %v68 = vrot.slane %v67, 1
    %v69 = vadd.f32 %v67, %v68
    %s70 = vtos %v69
    %v71 = vstv %s70
    %v72 = vadd.f32 %v57, %v71
    %vm73 = vcmask 0
    %74 = vst.msk [vmem:[#allocation2] sm:$0x1] %vm73, %v72
    %v75 = vld [vmem:[#allocation3] sm:$0x1]
    %v76 = vsel %vm60, %v56, 0.0
    %77 = vadd.xlane.f32.xlu0 %v76
    %v78 = vpop.xlane.xlu0 %77
    %v79 = vrot.slane %v78, 4
    %v80 = vadd.f32 %v78, %v79
    %v81 = vrot.slane %v80, 2
    %v82 = vadd.f32 %v80, %v81
    %v83 = vrot.slane %v82, 1
    %v84 = vadd.f32 %v82, %v83
    %s85 = vtos %v84
    %v86 = vstv %s85
    %v87 = vadd.f32 %v75, %v86
    %88 = vst.msk [vmem:[#allocation3] sm:$0x1] %vm73, %v87
    // Predicated region
    $region18: #{tpu_custom_call.1} parent=1 // pred_check
      %p89 = pneg %p15
    $region19: #{tpu_custom_call.1} parent=1 // pred_check_branch
      %91 = sbr.rel (%p89) target = $region21
    $region20: #{tpu_custom_call.1} parent=1 // pred_region
      %v92 = vld [vmem:[#allocation2] sm:$0x1]
      %v93 = vld [vmem:[#allocation3] sm:$0x1]
      %v94 = vrcp.pop %v93
      %v95 = vmul.f32 %v93, %v94
      %v96 = vsub.f32 1.0, %v95
      %v97 = vmul.f32 %v94, %v96
      %v98 = vadd.f32 %v94, %v97
      %vm99 = vweird.f32 %v93
      %vm100 = vweird.f32 %v94
      %vm101 = vmor %vm99, %vm100
      %v102 = vsel %vm101, %v94, %v98
      %v103 = vand.u32 2147483647, %v93
      %vm104 = vcmp.eq.f32.partialorder %v103, 8.507059e+37
      %v105 = vand.u32 %v93, 2147483648
      %v106 = vor.u32 1.1754944e-38, %v105
      %v107 = vsel %vm104, %v106, %v102
      %v108 = vmul.f32 %v92, %v107
      %109 = vst.msk [vmem:[#allocation4] sm:$0x1] %vm73, %v108
    $region21: #{tpu_custom_call.1} parent=1 // pred_fallthru
      _
    // Predicated region
    $region22: #{tpu_custom_call.1} parent=1 // pred_check
      _
    $region23: #{tpu_custom_call.1} parent=1 // pred_check_branch
      %111 = sbr.rel (0) target = $region25
    $region24: #{tpu_custom_call.1} parent=1 // pred_region
      %113 = vsyncadd [#allocation5], 0
      %s115 = sshll.u32 [#allocation4], 4
      %s116 = int_to_ptr.vmem [resolvable:$true] %s115
      %s117 = sshll.u32 %s3, 4
      %s118 = int_to_ptr.hbm [resolvable:$true] %s117
      %120 = dma.vmem_to_hbm [thread:$0]  %s116, 16, %s118, [#allocation5]
    $region25: #{tpu_custom_call.1} parent=1 // pred_fallthru
      _
    // Predicated region
    $region26: #{tpu_custom_call.1} parent=1 // pred_check
      _
    $region27: #{tpu_custom_call.1} parent=1 // pred_check_branch
      %122 = sbr.rel (0) target = $region29
    $region28: #{tpu_custom_call.1} parent=1 // pred_region
      %124 = dma.done [#allocation5], 16
    $region29: #{tpu_custom_call.1} parent=1 // pred_fallthru
      _
    %125 = vsyncpa [#allocation5], 1

</llo_original>
